<compile_context>
chip_gen: v6e
topology: v6e:2x2x1
jax: 0.10.0
libtpu: 0.0.40
codegen_flags: <defaults>
</compile_context>

<pallas_src>
import jax
import jax.numpy as jnp
from jax.experimental import pallas as pl
from jax.experimental.pallas import tpu as pltpu

C_IN = 64
C_HID = 32
C_OUT = 1


def _prediction_kernel(x_ref, w1t_ref, b1_ref, w2t_ref, b2_ref, o_ref):
    # x_ref:  (64, T)    w1t_ref: (32, 64)   b1_ref: (32, 1)
    # w2t_ref: (1, 32)   b2_ref: (1, 1) in SMEM      o_ref: (1, T)
    x = x_ref[...]
    h = jnp.dot(w1t_ref[...], x, preferred_element_type=jnp.float32) + b1_ref[...]
    h = jnp.maximum(h, 0.0)  # ReLU
    y = jnp.dot(w2t_ref[...], h, preferred_element_type=jnp.float32) + b2_ref[0, 0]
    o_ref[...] = y.astype(o_ref.dtype)


def _pick_tile_hw(hw, max_tile=8192):
    """Largest multiple-of-128 divisor of hw that is <= max_tile (no padding needed)."""
    if hw % 128 != 0:
        # TODO(synk): ragged spatial extents fall back to one full-extent block per batch
        # (block_shape == full array dim is always a legal Mosaic layout).
        return hw
    n = hw // 128
    best = 1
    d = 1
    while d * d <= n:
        if n % d == 0:
            for cand in (d, n // d):
                if cand > best and 128 * cand <= max_tile:
                    best = cand
        d += 1
    return 128 * best


def prediction_layer(x_nchw, w1, b1, w2, b2, *, max_tile_hw=8192):
    """Forward pass of _PredictionLayer.

    x_nchw: (B, 64, H, W) float32
    w1: (64, 32), b1: (32,), w2: (32, 1), b2: (1,)   (conv weights as (in, out) matrices)
    returns: (B, 1, H, W) float32
    """
    B, C, H, W = x_nchw.shape
    assert C == C_IN
    HW = H * W

    # Free, contiguous reshape: keep NCHW layout, flatten spatial dims onto lanes.
    x3 = x_nchw.reshape(B, C_IN, HW)

    # Tiny weight reshapes/transposes (negligible).
    w1t = jnp.transpose(w1, (1, 0))          # (32, 64)
    b1c = b1.reshape(C_HID, 1)               # (32, 1)  column bias (broadcasts over lanes)
    w2t = jnp.transpose(w2, (1, 0))          # (1, 32)
    b2s = b2.reshape(1, 1)                   # scalar -> SMEM

    tile_hw = _pick_tile_hw(HW, max_tile_hw)
    n_s = HW // tile_hw
    grid = (B, n_s)

    # Advisory cost estimate: per-pixel MACs = 64*32 + 32*1; bytes = in + weights + out.
    flops = 2 * B * HW * (C_IN * C_HID + C_HID * C_OUT)
    bytes_accessed = 4 * (B * HW * (C_IN + C_OUT) + C_IN * C_HID + C_HID + C_HID + 1)
    cost = pl.CostEstimate(flops=flops, transcendentals=0, bytes_accessed=bytes_accessed)

    out3 = pl.pallas_call(
        _prediction_kernel,
        out_shape=jax.ShapeDtypeStruct((B, C_OUT, HW), jnp.float32),
        grid_spec=pltpu.PrefetchScalarGridSpec(
            num_scalar_prefetch=0,
            grid=grid,
            in_specs=[
                # x tile: squeeze batch dim, (64, tile_hw) in the kernel
                pl.BlockSpec((None, C_IN, tile_hw), lambda b, s: (b, 0, s)),
                pl.BlockSpec((C_HID, C_IN), lambda b, s: (0, 0)),    # w1T (whole, resident)
                pl.BlockSpec((C_HID, 1), lambda b, s: (0, 0)),       # b1 column
                pl.BlockSpec((C_OUT, C_HID), lambda b, s: (0, 0)),   # w2T (whole, resident)
                pl.BlockSpec(memory_space=pltpu.MemorySpace.SMEM),   # b2 scalar
            ],
            out_specs=pl.BlockSpec((None, C_OUT, tile_hw), lambda b, s: (b, 0, s)),
        ),
        compiler_params=pltpu.CompilerParams(
            dimension_semantics=("parallel", "parallel"),
            vmem_limit_bytes=32 * 1024 * 1024,
        ),
        cost_estimate=cost,
    )(x3, w1t, b1c, w2t, b2s)

    # Free reshape back to NCHW (B, 1, H, W).
    return out3.reshape(B, C_OUT, H, W)


def _reference(x_nchw, w1, b1, w2, b2):
    # Pure-JAX reference of the PyTorch forward (1x1 convs as channel matmuls).
    x = jnp.transpose(x_nchw, (0, 2, 3, 1))                      # NHWC
    h = jnp.maximum(jnp.einsum("bhwc,cd->bhwd", x, w1) + b1, 0.0)
    y = jnp.einsum("bhwc,cd->bhwd", h, w2) + b2
    return jnp.transpose(y, (0, 3, 1, 2))                        # NCHW


if __name__ == "__main__":
    key = jax.random.PRNGKey(0)
    k_x, k_w1, k_b1, k_w2, k_b2 = jax.random.split(key, 5)

    B, H, W = 2, 16, 16
    x = jax.random.normal(k_x, (B, C_IN, H, W), dtype=jnp.float32)

    # Deterministic synthetic parameters (shapes match nn.Conv2d(64,32,1), nn.Conv2d(32,1,1)).
    # PyTorch weight layout is (out, in, 1, 1); we store the transposed 2-D form (in, out).
    w1 = jax.random.normal(k_w1, (C_IN, C_HID), dtype=jnp.float32) * 0.1
    b1 = jax.random.normal(k_b1, (C_HID,), dtype=jnp.float32) * 0.1
    w2 = jax.random.normal(k_w2, (C_HID, C_OUT), dtype=jnp.float32) * 0.1
    b2 = jax.random.normal(k_b2, (C_OUT,), dtype=jnp.float32) * 0.1

    out = prediction_layer(x, w1, b1, w2, b2)
    out = jax.block_until_ready(out)

    ref = _reference(x, w1, b1, w2, b2)
    assert out.shape == (B, 1, H, W), out.shape
    assert jnp.allclose(out, ref, atol=1e-4, rtol=1e-4), float(jnp.max(jnp.abs(out - ref)))

    print("KERNEL_OK")
</pallas_src>

<mosaic_0001>
module attributes {stable_mosaic.version = 11 : i64} {
  func.func @_prediction_kernel(%arg0: i32, %arg1: i32, %arg2: memref<1x64x256xf32, #tpu.memory_space<vmem>>, %arg3: memref<32x64xf32, #tpu.memory_space<vmem>>, %arg4: memref<32x1xf32, #tpu.memory_space<vmem>>, %arg5: memref<1x32xf32, #tpu.memory_space<vmem>>, %arg6: memref<1x1xf32, #tpu.memory_space<smem>>, %arg7: memref<1x1x256xf32, #tpu.memory_space<vmem>>) attributes {dimension_semantics = [#tpu.dimension_semantics<parallel>, #tpu.dimension_semantics<parallel>], iteration_bounds = array<i64: 2, 1>, scalar_prefetch = 0 : i64, scratch_operands = 0 : i64, tpu.core_type = #tpu.core_type<tc>, window_params = [{transform_indices = @transform_0, window_bounds = array<i64: 1, 64, 256>}, {pipeline_mode = #tpu.pipeline_mode<synchronous>, transform_indices = @transform_1, window_bounds = array<i64: 32, 64>}, {pipeline_mode = #tpu.pipeline_mode<synchronous>, transform_indices = @transform_2, window_bounds = array<i64: 32, 1>}, {pipeline_mode = #tpu.pipeline_mode<synchronous>, transform_indices = @transform_3, window_bounds = array<i64: 1, 32>}, {transform_indices = @transform_4, window_bounds = array<i64: 1, 1>}, {transform_indices = @transform_5, window_bounds = array<i64: 1, 1, 256>}]} {
    %c0 = arith.constant 0 : index
    %c0_0 = arith.constant 0 : index
    %c0_1 = arith.constant 0 : index
    %0 = vector.load %arg2[%c0, %c0_0, %c0_1] : memref<1x64x256xf32, #tpu.memory_space<vmem>>, vector<1x64x256xf32>
    %1 = vector.shape_cast %0 : vector<1x64x256xf32> to vector<64x256xf32>
    %c0_2 = arith.constant 0 : index
    %c0_3 = arith.constant 0 : index
    %2 = vector.load %arg3[%c0_2, %c0_3] : memref<32x64xf32, #tpu.memory_space<vmem>>, vector<32x64xf32>
    %cst = arith.constant dense<0.000000e+00> : vector<32x256xf32>
    %3 = tpu.matmul %2, %1, %cst {dimension_numbers = #tpu.dot_dimension_numbers<[1], [0], [0], [1], [0, 0, 1, 1], [], []>} : vector<32x64xf32>, vector<64x256xf32>, vector<32x256xf32> -> vector<32x256xf32>
    %c0_4 = arith.constant 0 : index
    %c0_5 = arith.constant 0 : index
    %4 = vector.load %arg4[%c0_4, %c0_5] : memref<32x1xf32, #tpu.memory_space<vmem>>, vector<32x1xf32>
    %5 = vector.broadcast %4 : vector<32x1xf32> to vector<32x256xf32>
    %6 = arith.addf %3, %5 : vector<32x256xf32>
    %cst_6 = arith.constant 0.000000e+00 : f32
    %7 = vector.broadcast %cst_6 : f32 to vector<32x256xf32>
    %8 = arith.maximumf %6, %7 : vector<32x256xf32>
    %c0_7 = arith.constant 0 : index
    %c0_8 = arith.constant 0 : index
    %9 = vector.load %arg5[%c0_7, %c0_8] : memref<1x32xf32, #tpu.memory_space<vmem>>, vector<1x32xf32>
    %cst_9 = arith.constant dense<0.000000e+00> : vector<1x256xf32>
    %10 = tpu.matmul %9, %8, %cst_9 {dimension_numbers = #tpu.dot_dimension_numbers<[1], [0], [0], [1], [0, 0, 1, 1], [], []>} : vector<1x32xf32>, vector<32x256xf32>, vector<1x256xf32> -> vector<1x256xf32>
    %c0_10 = arith.constant 0 : index
    %c0_11 = arith.constant 0 : index
    %11 = memref.load %arg6[%c0_10, %c0_11] : memref<1x1xf32, #tpu.memory_space<smem>>
    %12 = vector.broadcast %11 : f32 to vector<1x256xf32>
    %13 = arith.addf %10, %12 : vector<1x256xf32>
    %c0_12 = arith.constant 0 : index
    %c0_13 = arith.constant 0 : index
    %c0_14 = arith.constant 0 : index
    %14 = vector.load %arg7[%c0_12, %c0_13, %c0_14] : memref<1x1x256xf32, #tpu.memory_space<vmem>>, vector<1x1x256xf32>
    %15 = vector.shape_cast %14 : vector<1x1x256xf32> to vector<1x256xf32>
    %16 = vector.shape_cast %13 : vector<1x256xf32> to vector<1x1x256xf32>
    tpu.vector_store %arg7[%c0_12, %c0_13, %c0_14], %16 {strides = array<i32>} : memref<1x1x256xf32, #tpu.memory_space<vmem>>, vector<1x1x256xf32>,
    return
  }
  func.func @transform_0(%arg0: i32, %arg1: i32) -> (i32, i32, i32) {
    %c0_i32 = arith.constant 0 : i32
    %c0_i32_0 = arith.constant 0 : i32
    return %arg0, %c0_i32, %arg1 : i32, i32, i32
  }
  func.func @transform_1(%arg0: i32, %arg1: i32) -> (i32, i32) {
    %c0_i32 = arith.constant 0 : i32
    %c0_i32_0 = arith.constant 0 : i32
    %c0_i32_1 = arith.constant 0 : i32
    return %c0_i32, %c0_i32_0 : i32, i32
  }
  func.func @transform_2(%arg0: i32, %arg1: i32) -> (i32, i32) {
    %c0_i32 = arith.constant 0 : i32
    %c0_i32_0 = arith.constant 0 : i32
    %c0_i32_1 = arith.constant 0 : i32
    return %c0_i32, %c0_i32_0 : i32, i32
  }
  func.func @transform_3(%arg0: i32, %arg1: i32) -> (i32, i32) {
    %c0_i32 = arith.constant 0 : i32
    %c0_i32_0 = arith.constant 0 : i32
    %c0_i32_1 = arith.constant 0 : i32
    return %c0_i32, %c0_i32_0 : i32, i32
  }
  func.func @transform_4(%arg0: i32, %arg1: i32) -> (i32, i32) {
    %c0_i32 = arith.constant 0 : i32
    %c0_i32_0 = arith.constant 0 : i32
    %c0_i32_1 = arith.constant 0 : i32
    return %c0_i32, %c0_i32_0 : i32, i32
  }
  func.func @transform_5(%arg0: i32, %arg1: i32) -> (i32, i32, i32) {
    %c0_i32 = arith.constant 0 : i32
    %c0_i32_0 = arith.constant 0 : i32
    return %arg0, %c0_i32, %arg1 : i32, i32, i32
  }
}

</mosaic_0001>

<llo_original>
// kernel: tpu_custom_call.1
$region0: #{tpu_custom_call.1}
  #allocation0 [shape = 'u32[]', space=smem, size = 0x4, offset = 0x4, fixed_abs, tag = 'smem constant byte address 0x4 - core index']
  #allocation1 [shape = 'u32[144,128]{1,0:T(1,128)}', space=vmem, size = 0x12000, scoped, tag = 'internal scratch']
  #allocation2 [shape = 'f32[1,1]{1,0:T(1,128)S(6)}', space=smem, size = 0x200, scoped, tag = 'scoped memory for tpu_custom_call.1']
  %s0 = inlined_call_operand.hbm [shape: f32[2,64,256], index: 0, kind: input, shape index: {}]
  %s1 = inlined_call_operand.vmem [shape: f32[32,64], index: 1, kind: input, shape index: {}]
  %s2 = inlined_call_operand.vmem [shape: f32[32,1], index: 2, kind: input, shape index: {}]
  %s3 = inlined_call_operand.vmem [shape: f32[1,32], index: 3, kind: input, shape index: {}]
  %s4 = inlined_call_operand.<no memory space> [shape: f32[1,1], index: 4, kind: input, shape index: {}]
  %s5 = inlined_call_operand.hbm [shape: f32[2,1,256], index: 5, kind: output, shape index: {}]
  %s6 = sld [smem:[#allocation0]]
  $region57: #{tpu_custom_call.1} parent=0
    _
  %s8 = ssub.s32 1, %s6
  %s9 = scalar_select 0, %s8, %s6
  %10 = sst [smem:[#allocation2]] %s4
  $region1: #{tpu_custom_call.1} parent=0
    #allocation3 [shape = 'u8[131072]{0}', space=vmem, size = 0x20000, scoped, tag = 'input window, operand 0']
    #allocation4 [shape = 's32[2]{0}', space=sflag, size = 0x8, scoped, tag = 'scoped memory for tpu_custom_call.1']
    #allocation5 [shape = 's32[2]{0}', space=sflag, size = 0x8, scoped, tag = 'scoped memory for tpu_custom_call.1']
    #allocation6 [shape = 'u8[2048]{0}', space=vmem, size = 0x800, scoped, tag = 'output window, operand 0']
    %11 = vsyncpa [#allocation4], 0
    %s12 = scalar_lea.sflag [#allocation4], 1
    %13 = vsyncpa %s12, 0
    %14 = vsyncpa [#allocation5], 0
    %s15 = scalar_lea.sflag [#allocation5], 1
    %16 = vsyncpa %s15, 0
    loop: start=0, step=1, limit=4
    $region2: #{tpu_custom_call.1} parent=1 // loop_pre_header
      _
    $region3: #{tpu_custom_call.1} parent=1 // loop_header
      %s18 = sphi 0, %s22
      %p19 = scmp.ge.s32.totalorder %s18, 4
      %s25 = sphi 0, %s37
      %s26 = sphi 0, %s33
      %s27 = sphi 0, %s25
      %s28 = sphi 0, %s26
      %s29 = sphi 0, %s27
      %s30 = sphi 0, %s28
      %s42 = sphi 0, %s44
      %s45 = sphi 0, %s42
      %s46 = sphi 0, %s45
      %s62 = sphi 0, %s46
      %s66 = sphi 0, %s66
      %s68 = sphi 0, %s66
      %s69 = sphi 0, %s68
      %s83 = sphi 0, %s69
      %s87 = sphi 0, %s87
      %s89 = sphi 0, %s87
      %s90 = sphi 0, %s89
      %s104 = sphi 0, %s90
      %s108 = sphi 0, %s108
      %s110 = sphi 0, %s108
      %s111 = sphi 0, %s110
      %s125 = sphi 0, %s111
      %s129 = sphi 0, %s129
      %s131 = sphi 0, %s129
      %s132 = sphi 0, %s131
      %s146 = sphi 0, %s132
      %s154 = sphi 0, %s156
      %s157 = sphi 0, %s154
      %s158 = sphi 0, %s157
      %s174 = sphi 0, %s158
    $region4: #{tpu_custom_call.1} parent=1 // loop_header_branch
      %21 = sbr.rel (%p19) target = $region8
    $region5: #{tpu_custom_call.1} parent=1 // loop_body
      %s23 = ssub.s32 %s18, 1
      %s24 = ssub.s32 %s18, 2
      %s31 = sadd.s32 1, %s26
      %p32 = scmp.ge.s32.totalorder %s31, 1
      %s33 = scalar_select %p32, 0, %s31
      %s34 = sadd.s32 1, %s25
      %s35 = scalar_select %p32, %s34, %s25
      %p36 = scmp.ge.s32.totalorder %s35, 2
      %s37 = scalar_select %p36, 0, %s35
      %s38 = ssub.s32 %s25, %s37
      %s39 = ssub.s32 %s26, %s33
      %s40 = sor.u32 %s38, %s39
      %p41 = scmp.eq.s32.totalorder %s40, 0
      %s43 = sadd.s32 %s42, 1
      %s44 = scalar_select %p41, %s42, %s43
      %p47 = pneg %p41
      %p48 = scmp.eq.s32.totalorder %s18, 1
      %p49 = por %p47, %p48
      %p50 = scmp.ne.s32.totalorder %s42, %s45
      %p51 = scmp.eq.s32.totalorder %s18, 0
      %p52 = por %p50, %p51
      %p53 = scmp.ne.s32.totalorder %s42, %s45
      %p54 = scmp.eq.s32.totalorder %s23, 1
      %p55 = por %p53, %p54
      %p56 = scmp.ne.s32.totalorder %s45, %s46
      %p57 = scmp.eq.s32.totalorder %s23, 0
      %p58 = por %p56, %p57
      %p59 = scmp.ne.s32.totalorder %s45, %s46
      %p60 = scmp.eq.s32.totalorder %s24, 1
      %p61 = por %p59, %p60
      %p63 = scmp.ne.s32.totalorder %s46, %s62
      %p64 = scmp.eq.s32.totalorder %s24, 0
      %p65 = por %p63, %p64
      %s67 = sadd.s32 %s66, 1
      %p70 = scmp.eq.s32.totalorder %s18, 1
      %p71 = scmp.ne.s32.totalorder %s66, %s68
      %p72 = scmp.eq.s32.totalorder %s18, 0
      %p73 = por %p71, %p72
      %p74 = scmp.ne.s32.totalorder %s66, %s68
      %p75 = scmp.eq.s32.totalorder %s23, 1
      %p76 = por %p74, %p75
      %p77 = scmp.ne.s32.totalorder %s68, %s69
      %p78 = scmp.eq.s32.totalorder %s23, 0
      %p79 = por %p77, %p78
      %p80 = scmp.ne.s32.totalorder %s68, %s69
      %p81 = scmp.eq.s32.totalorder %s24, 1
      %p82 = por %p80, %p81
      %p84 = scmp.ne.s32.totalorder %s69, %s83
      %p85 = scmp.eq.s32.totalorder %s24, 0
      %p86 = por %p84, %p85
      %s88 = sadd.s32 %s87, 1
      %p91 = scmp.eq.s32.totalorder %s18, 1
      %p92 = scmp.ne.s32.totalorder %s87, %s89
      %p93 = scmp.eq.s32.totalorder %s18, 0
      %p94 = por %p92, %p93
      %p95 = scmp.ne.s32.totalorder %s87, %s89
      %p96 = scmp.eq.s32.totalorder %s23, 1
      %p97 = por %p95, %p96
      %p98 = scmp.ne.s32.totalorder %s89, %s90
      %p99 = scmp.eq.s32.totalorder %s23, 0
      %p100 = por %p98, %p99
      %p101 = scmp.ne.s32.totalorder %s89, %s90
      %p102 = scmp.eq.s32.totalorder %s24, 1
      %p103 = por %p101, %p102
      %p105 = scmp.ne.s32.totalorder %s90, %s104
      %p106 = scmp.eq.s32.totalorder %s24, 0
      %p107 = por %p105, %p106
      %s109 = sadd.s32 %s108, 1
      %p112 = scmp.eq.s32.totalorder %s18, 1
      %p113 = scmp.ne.s32.totalorder %s108, %s110
      %p114 = scmp.eq.s32.totalorder %s18, 0
      %p115 = por %p113, %p114
      %p116 = scmp.ne.s32.totalorder %s108, %s110
      %p117 = scmp.eq.s32.totalorder %s23, 1
      %p118 = por %p116, %p117
      %p119 = scmp.ne.s32.totalorder %s110, %s111
      %p120 = scmp.eq.s32.totalorder %s23, 0
      %p121 = por %p119, %p120
      %p122 = scmp.ne.s32.totalorder %s110, %s111
      %p123 = scmp.eq.s32.totalorder %s24, 1
      %p124 = por %p122, %p123
      %p126 = scmp.ne.s32.totalorder %s111, %s125
      %p127 = scmp.eq.s32.totalorder %s24, 0
      %p128 = por %p126, %p127
      %s130 = sadd.s32 %s129, 1
      %p133 = scmp.eq.s32.totalorder %s18, 1
      %p134 = scmp.ne.s32.totalorder %s129, %s131
      %p135 = scmp.eq.s32.totalorder %s18, 0
      %p136 = por %p134, %p135
      %p137 = scmp.ne.s32.totalorder %s129, %s131
      %p138 = scmp.eq.s32.totalorder %s23, 1
      %p139 = por %p137, %p138
      %p140 = scmp.ne.s32.totalorder %s131, %s132
      %p141 = scmp.eq.s32.totalorder %s23, 0
      %p142 = por %p140, %p141
      %p143 = scmp.ne.s32.totalorder %s131, %s132
      %p144 = scmp.eq.s32.totalorder %s24, 1
      %p145 = por %p143, %p144
      %p147 = scmp.ne.s32.totalorder %s132, %s146
      %p148 = scmp.eq.s32.totalorder %s24, 0
      %p149 = por %p147, %p148
      %s150 = ssub.s32 %s25, %s37
      %s151 = ssub.s32 %s26, %s33
      %s152 = sor.u32 %s150, %s151
      %p153 = scmp.eq.s32.totalorder %s152, 0
      %s155 = sadd.s32 %s154, 1
      %s156 = scalar_select %p153, %s154, %s155
      %p159 = pneg %p153
      %p160 = scmp.eq.s32.totalorder %s18, 1
      %p161 = por %p159, %p160
      %p162 = scmp.ne.s32.totalorder %s154, %s157
      %p163 = scmp.eq.s32.totalorder %s18, 0
      %p164 = por %p162, %p163
      %p165 = scmp.ne.s32.totalorder %s154, %s157
      %p166 = scmp.eq.s32.totalorder %s23, 1
      %p167 = por %p165, %p166
      %p168 = scmp.ne.s32.totalorder %s157, %s158
      %p169 = scmp.eq.s32.totalorder %s23, 0
      %p170 = por %p168, %p169
      %p171 = scmp.ne.s32.totalorder %s157, %s158
      %p172 = scmp.eq.s32.totalorder %s24, 1
      %p173 = por %p171, %p172
      %p175 = scmp.ne.s32.totalorder %s158, %s174
      %p176 = scmp.eq.s32.totalorder %s24, 0
      %p177 = por %p175, %p176
      %p178 = scmp.le.s32.totalorder 1, %s18
      %p179 = scmp.lt.s32.totalorder %s18, 3
      %p180 = pnand %p178, %p179
      %p181 = pneg %p180
      // Predicated region
      $region9: #{tpu_custom_call.1} parent=5 // pred_check
        _
      $region10: #{tpu_custom_call.1} parent=5 // pred_check_branch
        %183 = sbr.rel (%p180) target = $region12
      $region11: #{tpu_custom_call.1} parent=5 // pred_region
        %s184 = ssub.s32 %s18, 1
        // Predicated region
        $region13: #{tpu_custom_call.1} parent=11 // pred_check
          %p185 = pneg %p79
        $region14: #{tpu_custom_call.1} parent=11 // pred_check_branch
          %187 = sbr.rel (%p185) target = $region16
        $region15: #{tpu_custom_call.1} parent=11 // pred_region
          _
        $region16: #{tpu_custom_call.1} parent=11 // pred_fallthru
          _
        // Predicated region
        $region17: #{tpu_custom_call.1} parent=11 // pred_check
          %p188 = pneg %p100
        $region18: #{tpu_custom_call.1} parent=11 // pred_check_branch
          %190 = sbr.rel (%p188) target = $region20
        $region19: #{tpu_custom_call.1} parent=11 // pred_region
          _
        $region20: #{tpu_custom_call.1} parent=11 // pred_fallthru
          _
        // Predicated region
        $region21: #{tpu_custom_call.1} parent=11 // pred_check
          %p191 = pneg %p121
        $region22: #{tpu_custom_call.1} parent=11 // pred_check_branch
          %193 = sbr.rel (%p191) target = $region24
        $region23: #{tpu_custom_call.1} parent=11 // pred_region
          _
        $region24: #{tpu_custom_call.1} parent=11 // pred_fallthru
          _
        // Predicated region
        $region25: #{tpu_custom_call.1} parent=11 // pred_check
          %p194 = pneg %p142
        $region26: #{tpu_custom_call.1} parent=11 // pred_check_branch
          %196 = sbr.rel (%p194) target = $region28
        $region27: #{tpu_custom_call.1} parent=11 // pred_region
          _
        $region28: #{tpu_custom_call.1} parent=11 // pred_fallthru
          _
      $region12: #{tpu_custom_call.1} parent=5 // pred_fallthru
        _
      %p197 = scmp.lt.s32.totalorder %s18, 2
      // Predicated region
      $region29: #{tpu_custom_call.1} parent=5 // pred_check
        %p198 = pneg %p197
      $region30: #{tpu_custom_call.1} parent=5 // pred_check_branch
        %200 = sbr.rel (%p198) target = $region32
      $region31: #{tpu_custom_call.1} parent=5 // pred_region
        // Predicated region
        $region33: #{tpu_custom_call.1} parent=31 // pred_check
          %p201 = pneg %p52
        $region34: #{tpu_custom_call.1} parent=31 // pred_check_branch
          %203 = sbr.rel (%p201) target = $region36
        $region35: #{tpu_custom_call.1} parent=31 // pred_region
          %s204 = sand.u32 %s42, 1
          %s205 = scalar_lea.sflag [#allocation4], %s204
          %s206 = sand.u32 %s42, 1
          %s207 = smul.addr %s206, 128
          %s208 = scalar_lea.vmem [#allocation3], %s207
          %s209 = smul.u32 2, %s26
          %s211 = ssub.s32 2048, 2048
          %212 = vsyncadd %s205, %s211
          %s213 = smul.addr %s25, 16
          %s214 = sadd.s32 %s209, %s213
          %s215 = smul.addr %s214, 128
          %s216 = scalar_lea.hbm %s0, %s215
          %s217 = sshll.u32 %s208, 4
          %s218 = int_to_ptr.vmem [resolvable:$true] %s217
          %223 = dma.hbm_to_vmem [thread:$0]  %s216, 2048, %s218, %s205, 256, 256, 16
        $region36: #{tpu_custom_call.1} parent=31 // pred_fallthru
          _
      $region32: #{tpu_custom_call.1} parent=5 // pred_fallthru
        _
      %p224 = scmp.le.s32.totalorder 1, %s18
      %p225 = scmp.lt.s32.totalorder %s18, 3
      %p226 = pnand %p224, %p225
      %p227 = pneg %p226
      // Predicated region
      $region37: #{tpu_custom_call.1} parent=5 // pred_check
        _
      $region38: #{tpu_custom_call.1} parent=5 // pred_check_branch
        %229 = sbr.rel (%p226) target = $region40
      $region39: #{tpu_custom_call.1} parent=5 // pred_region
        %s230 = ssub.s32 %s18, 1
        %s231 = sand.u32 %s45, 1
        %s232 = scalar_lea.sflag [#allocation4], %s231
        %s233 = sand.u32 %s45, 1
        %s234 = smul.addr %s233, 128
        %s235 = scalar_lea.vmem [#allocation3], %s234
        // Predicated region
        $region41: #{tpu_custom_call.1} parent=39 // pred_check
          %p236 = pneg %p58
        $region42: #{tpu_custom_call.1} parent=39 // pred_check_branch
          %238 = sbr.rel (%p236) target = $region44
        $region43: #{tpu_custom_call.1} parent=39 // pred_region
          %239 = dma.done %s232, 2048
        $region44: #{tpu_custom_call.1} parent=39 // pred_fallthru
          _
        %s240 = sand.u32 %s45, 1
        %s241 = scalar_lea.sflag [#allocation4], %s240
        %s242 = sand.u32 %s45, 1
        %s243 = smul.addr %s242, 128
        %s244 = scalar_lea.vmem [#allocation3], %s243
        %p245 = pneg %p58
        %p246 = pneg %p55
        %p247 = pneg %p79
        %p248 = pneg %p76
        %p249 = pneg %p100
        %p250 = pneg %p97
        %p251 = pneg %p121
        %p252 = pneg %p118
        %p253 = pneg %p142
        %p254 = pneg %p139
        %p255 = pneg %p170
        %p256 = pneg %p167
        %s257 = sand.u32 %s157, 1
        %s258 = scalar_lea.sflag [#allocation5], %s257
        %s259 = sand.u32 %s157, 1
        %s260 = smul.addr %s259, 2
        %s261 = scalar_lea.vmem [#allocation6], %s260
        %s262 = smul.u32 2, %s28
        %s263 = smul.u32 2, %s28
        %v264 = vld [vmem:[%s235] sm:$0xff]
        %v265 = vld [vmem:[%s235 + $0x8] sm:$0xff]
        %v266 = vld [vmem:[%s235 + $0x10] sm:$0xff]
        %v267 = vld [vmem:[%s235 + $0x18] sm:$0xff]
        %v268 = vld [vmem:[%s235 + $0x20] sm:$0xff]
        %v269 = vld [vmem:[%s235 + $0x28] sm:$0xff]
        %v270 = vld [vmem:[%s235 + $0x30] sm:$0xff]
        %v271 = vld [vmem:[%s235 + $0x38] sm:$0xff]
        %v272 = vld [vmem:[%s235 + $0x40] sm:$0xff]
        %v273 = vld [vmem:[%s235 + $0x48] sm:$0xff]
        %v274 = vld [vmem:[%s235 + $0x50] sm:$0xff]
        %v275 = vld [vmem:[%s235 + $0x58] sm:$0xff]
        %v276 = vld [vmem:[%s235 + $0x60] sm:$0xff]
        %v277 = vld [vmem:[%s235 + $0x68] sm:$0xff]
        %v278 = vld [vmem:[%s235 + $0x70] sm:$0xff]
        %v279 = vld [vmem:[%s235 + $0x78] sm:$0xff]
        %v280 = vld [vmem:[%s1] sm:$0xff]
        %v281 = vld [vmem:[%s1 + $0x8] sm:$0xff]
        %v282 = vld [vmem:[%s1 + $0x10] sm:$0xff]
        %v283 = vld [vmem:[%s1 + $0x18] sm:$0xff]
        %v284 = vld [vmem:[%s2] sm:$0xff]
        %v285 = vld [vmem:[%s2 + $0x8] sm:$0xff]
        %v286 = vld [vmem:[%s2 + $0x10] sm:$0xff]
        %v287 = vld [vmem:[%s2 + $0x18] sm:$0xff]
        %289 = vset.pattern.permute.xlu0 0
        %290 = vperm.xlu0 %289, %v284
        %v291 = vpop.permute.xlu0 %290
        %294 = vset.pattern.permute.xlu0 0
        %295 = vperm.xlu0 %294, %v285
        %v296 = vpop.permute.xlu0 %295
        %299 = vset.pattern.permute.xlu0 0
        %300 = vperm.xlu0 %299, %v286
        %v301 = vpop.permute.xlu0 %300
        %304 = vset.pattern.permute.xlu0 0
        %305 = vperm.xlu0 %304, %v287
        %v306 = vpop.permute.xlu0 %305
        %vm308 = vcmask 523264
        %v310 = vsel %vm308, %v280, 0
        %v313 = vsel %vm308, %v281, 0
        %v316 = vsel %vm308, %v282, 0
        %v319 = vsel %vm308, %v283, 0
        %321 = vmatprep.subr.mxu0 0.0
        %322 = vmatpush1.msra.mxu0 0.0
        %323 = vmatprep.subr.mxu0 0.0
        %324 = vmatpush1.msra.mxu0 0.0
        %325 = vmatprep.subr.mxu0 0.0
        %326 = vmatpush1.msra.mxu0 0.0
        %327 = vmatprep.subr.mxu0 0.0
        %328 = vmatpush1.msra.mxu0 0.0
        %329 = vmatprep.subr.mxu0 0.0
        %330 = vmatpush1.msra.mxu0 0.0
        %331 = vmatprep.subr.mxu0 0.0
        %332 = vmatpush1.msra.mxu0 0.0
        %333 = vmatprep.subr.mxu0 0.0
        %334 = vmatpush1.msra.mxu0 0.0
        %335 = vmatprep.subr.mxu0 0.0
        %336 = vmatpush1.msra.mxu0 0.0
        %337 = vmatprep.subr.mxu0 %v279
        %338 = vmatpush1.msra.mxu0 %v278
        %339 = vmatprep.subr.mxu0 %v277
        %340 = vmatpush1.msra.mxu0 %v276
        %341 = vmatprep.subr.mxu0 %v275
        %342 = vmatpush1.msra.mxu0 %v274
        %343 = vmatprep.subr.mxu0 %v273
        %344 = vmatpush1.msra.mxu0 %v272
        %345 = vmatprep.subr.mxu0 %v271
        %346 = vmatpush1.msra.mxu0 %v270
        %347 = vmatprep.subr.mxu0 %v269
        %348 = vmatpush1.msra.mxu0 %v268
        %349 = vmatprep.subr.mxu0 %v267
        %350 = vmatpush1.msra.mxu0 %v266
        %351 = vmatprep.subr.mxu0 %v265
        %352 = vmatpush1.msra.mxu0 %v264
        %353 = vmatprep.subr.mxu0 0.0
        %354 = vmatpush2.msra.mxu0 0.0
        %355 = vmatprep.subr.mxu0 0.0
        %356 = vmatpush2.msra.mxu0 0.0
        %357 = vmatprep.subr.mxu0 0.0
        %358 = vmatpush2.msra.mxu0 0.0
        %359 = vmatprep.subr.mxu0 0.0
        %360 = vmatpush2.msra.mxu0 0.0
        %361 = vmatprep.subr.mxu0 0.0
        %362 = vmatpush2.msra.mxu0 0.0
        %363 = vmatprep.subr.mxu0 0.0
        %364 = vmatpush2.msra.mxu0 0.0
        %365 = vmatprep.subr.mxu0 0.0
        %366 = vmatpush2.msra.mxu0 0.0
        %367 = vmatprep.subr.mxu0 0.0
        %368 = vmatpush2.msra.mxu0 0.0
        %369 = vmatprep.subr.mxu0 0.0
        %370 = vmatpush2.msra.mxu0 0.0
        %371 = vmatprep.subr.mxu0 0.0
        %372 = vmatpush2.msra.mxu0 0.0
        %373 = vmatprep.subr.mxu0 0.0
        %374 = vmatpush2.msra.mxu0 0.0
        %375 = vmatprep.subr.mxu0 0.0
        %376 = vmatpush2.msra.mxu0 0.0
        %377 = vmatprep.subr.mxu0 0.0
        %378 = vmatpush2.msra.mxu0 0.0
        %379 = vmatprep.subr.mxu0 0.0
        %380 = vmatpush2.msra.mxu0 0.0
        %381 = vmatprep.subr.mxu0 0.0
        %382 = vmatpush2.msra.mxu0 0.0
        %383 = vmatprep.subr.mxu0 0.0
        %384 = vmatpush2.msra.mxu0 0.0
        %385 = vmatprep.mubr.f32.mxu0 0.0
        %386 = vmatmul.mubr.f32.gmra.mxu0 %v310
        %v387 = vpop.f32.mrf.mxu0
        %v388 = vadd.f32 %v291, %v387
        %v389 = vpop.f32.mrf.mxu0
        %v390 = vadd.f32 %v291, %v389
        %391 = vmatprep.mubr.f32.mxu0 0.0
        %392 = vmatmul.mubr.f32.gmra.mxu0 %v313
        %v393 = vpop.f32.mrf.mxu0
        %v394 = vadd.f32 %v296, %v393
        %v395 = vpop.f32.mrf.mxu0
        %v396 = vadd.f32 %v296, %v395
        %397 = vmatprep.mubr.f32.mxu0 0.0
        %398 = vmatmul.mubr.f32.gmra.mxu0 %v316
        %v399 = vpop.f32.mrf.mxu0
        %v400 = vadd.f32 %v301, %v399
        %v401 = vpop.f32.mrf.mxu0
        %v402 = vadd.f32 %v301, %v401
        %403 = vmatprep.mubr.f32.mxu0 0.0
        %404 = vmatmul.mubr.f32.gmra.mxu0 %v319
        %v405 = vpop.f32.mrf.mxu0
        %v406 = vadd.f32 %v306, %v405
        %v407 = vpop.f32.mrf.mxu0
        %v408 = vadd.f32 %v306, %v407
        %409 = vdwg.mxu0
        %v410 = vmax.f32 %v388, 0.0
        %v411 = vmax.f32 %v390, 0.0
        %v412 = vmax.f32 %v394, 0.0
        %v413 = vmax.f32 %v396, 0.0
        %v414 = vmax.f32 %v400, 0.0
        %v415 = vmax.f32 %v402, 0.0
        %v416 = vmax.f32 %v406, 0.0
        %v417 = vmax.f32 %v408, 0.0
        %v418 = vld [vmem:[%s3] sm:$0x1]
        %s419 = sld [smem:[#allocation2]]
        %v420 = vstv %s419
        %vm421 = vcmask 261120
        %v423 = vsel %vm421, %v418, 0
        %425 = vmatprep.subr.mxu0 0.0
        %426 = vmatpush1.msra.mxu0 0.0
        %427 = vmatprep.subr.mxu0 0.0
        %428 = vmatpush1.msra.mxu0 0.0
        %429 = vmatprep.subr.mxu0 0.0
        %430 = vmatpush1.msra.mxu0 0.0
        %431 = vmatprep.subr.mxu0 0.0
        %432 = vmatpush1.msra.mxu0 0.0
        %433 = vmatprep.subr.mxu0 0.0
        %434 = vmatpush1.msra.mxu0 0.0
        %435 = vmatprep.subr.mxu0 0.0
        %436 = vmatpush1.msra.mxu0 0.0
        %437 = vmatprep.subr.mxu0 0.0
        %438 = vmatpush1.msra.mxu0 0.0
        %439 = vmatprep.subr.mxu0 0.0
        %440 = vmatpush1.msra.mxu0 0.0
        %441 = vmatprep.subr.mxu0 0.0
        %442 = vmatpush1.msra.mxu0 0.0
        %443 = vmatprep.subr.mxu0 0.0
        %444 = vmatpush1.msra.mxu0 0.0
        %445 = vmatprep.subr.mxu0 0.0
        %446 = vmatpush1.msra.mxu0 0.0
        %447 = vmatprep.subr.mxu0 0.0
        %448 = vmatpush1.msra.mxu0 0.0
        %449 = vmatprep.subr.mxu0 %v417
        %450 = vmatpush1.msra.mxu0 %v416
        %451 = vmatprep.subr.mxu0 %v415
        %452 = vmatpush1.msra.mxu0 %v414
        %453 = vmatprep.subr.mxu0 %v413
        %454 = vmatpush1.msra.mxu0 %v412
        %455 = vmatprep.subr.mxu0 %v411
        %456 = vmatpush1.msra.mxu0 %v410
        %457 = vmatprep.subr.mxu0 0.0
        %458 = vmatpush2.msra.mxu0 0.0
        %459 = vmatprep.subr.mxu0 0.0
        %460 = vmatpush2.msra.mxu0 0.0
        %461 = vmatprep.subr.mxu0 0.0
        %462 = vmatpush2.msra.mxu0 0.0
        %463 = vmatprep.subr.mxu0 0.0
        %464 = vmatpush2.msra.mxu0 0.0
        %465 = vmatprep.subr.mxu0 0.0
        %466 = vmatpush2.msra.mxu0 0.0
        %467 = vmatprep.subr.mxu0 0.0
        %468 = vmatpush2.msra.mxu0 0.0
        %469 = vmatprep.subr.mxu0 0.0
        %470 = vmatpush2.msra.mxu0 0.0
        %471 = vmatprep.subr.mxu0 0.0
        %472 = vmatpush2.msra.mxu0 0.0
        %473 = vmatprep.subr.mxu0 0.0
        %474 = vmatpush2.msra.mxu0 0.0
        %475 = vmatprep.subr.mxu0 0.0
        %476 = vmatpush2.msra.mxu0 0.0
        %477 = vmatprep.subr.mxu0 0.0
        %478 = vmatpush2.msra.mxu0 0.0
        %479 = vmatprep.subr.mxu0 0.0
        %480 = vmatpush2.msra.mxu0 0.0
        %481 = vmatprep.subr.mxu0 0.0
        %482 = vmatpush2.msra.mxu0 0.0
        %483 = vmatprep.subr.mxu0 0.0
        %484 = vmatpush2.msra.mxu0 0.0
        %485 = vmatprep.subr.mxu0 0.0
        %486 = vmatpush2.msra.mxu0 0.0
        %487 = vmatprep.subr.mxu0 0.0
        %488 = vmatpush2.msra.mxu0 0.0
        %489 = vmatprep.mubr.f32.mxu0 0.0
        %490 = vmatmul.mubr.f32.gmra.mxu0 %v423
        %v491 = vpop.f32.mrf.mxu0
        %v492 = vadd.f32 %v420, %v491
        %v493 = vpop.f32.mrf.mxu0
        %v494 = vadd.f32 %v420, %v493
        %495 = vdwg.mxu0
        %v498 = vcombine.low %v492, %v494
        %v500 = vunpack.c.l.s4 1966171168
        %v501 = vunpack.c.0.s8 %v500
        %v502 = vlaneseq
        %v503 = vshrl.u32 %v502, 7
        %v504 = vsub.s32 %v501, %v503
        %v505 = vrot.slane %v498, %v504
        %v507 = vunpack.c.l.s4 1966171168
        %v508 = vunpack.c.0.s8 %v507
        %v509 = vlaneseq
        %v510 = vshrl.u32 %v509, 7
        %v511 = vsub.s32 %v508, %v510
        %v512 = vrot.slane %v505, %v511
        %v514 = vlaneseq
        %vm515 = vcmp.ge.s32.totalorder %v514, 0
        %vm516 = vcmp.lt.s32.totalorder %v514, 256
        %vm517 = vmand %vm515, %vm516
        %518 = vst.msk [vmem:[%s261] sm:$0x3] %vm517, %v512
        %s519 = sand.u32 %s157, 1
        %s520 = scalar_lea.sflag [#allocation5], %s519
        %s521 = sand.u32 %s157, 1
        %s522 = smul.addr %s521, 2
        %s523 = scalar_lea.vmem [#allocation6], %s522
        // Predicated region
        $region45: #{tpu_custom_call.1} parent=39 // pred_check
          %p524 = pneg %p167
        $region46: #{tpu_custom_call.1} parent=39 // pred_check_branch
          %526 = sbr.rel (%p524) target = $region48
        $region47: #{tpu_custom_call.1} parent=39 // pred_region
          %s527 = smul.u32 2, %s28
          %s529 = ssub.s32 32, 32
          %530 = vsyncadd %s520, %s529
          %s531 = smul.addr %s27, 2
          %s532 = sadd.s32 %s527, %s531
          %s533 = smul.addr %s532, 16
          %s534 = scalar_lea.hbm %s5, %s533
          %s536 = sshll.u32 %s523, 4
          %s537 = int_to_ptr.vmem [resolvable:$true] %s536
          %539 = dma.vmem_to_hbm [thread:$0]  %s537, 32, %s534, %s520
        $region48: #{tpu_custom_call.1} parent=39 // pred_fallthru
          _
      $region40: #{tpu_custom_call.1} parent=5 // pred_fallthru
        _
      %p540 = scmp.le.s32.totalorder 2, %s18
      // Predicated region
      $region49: #{tpu_custom_call.1} parent=5 // pred_check
        %p541 = pneg %p540
      $region50: #{tpu_custom_call.1} parent=5 // pred_check_branch
        %543 = sbr.rel (%p541) target = $region52
      $region51: #{tpu_custom_call.1} parent=5 // pred_region
        %s544 = ssub.s32 %s18, 2
        // Predicated region
        $region53: #{tpu_custom_call.1} parent=51 // pred_check
          %p545 = pneg %p173
        $region54: #{tpu_custom_call.1} parent=51 // pred_check_branch
          %547 = sbr.rel (%p545) target = $region56
        $region55: #{tpu_custom_call.1} parent=51 // pred_region
          %s548 = sand.u32 %s158, 1
          %s549 = scalar_lea.sflag [#allocation5], %s548
          %s550 = sand.u32 %s158, 1
          %s551 = smul.addr %s550, 2
          %s552 = scalar_lea.vmem [#allocation6], %s551
          %553 = dma.done %s549, 32
        $region56: #{tpu_custom_call.1} parent=51 // pred_fallthru
          _
      $region52: #{tpu_custom_call.1} parent=5 // pred_fallthru
        _
    $region6: #{tpu_custom_call.1} parent=1 // loop_footer
      %s22 = sadd.s32 1, %s18
    $region7: #{tpu_custom_call.1} parent=1 // loop_footer_branch
      %17 = sbr.rel target = $region3
    $region8: #{tpu_custom_call.1} parent=1 // loop_exit
      _
    %554 = vsyncpa [#allocation4], 1
    %s555 = scalar_lea.sflag [#allocation4], 1
    %556 = vsyncpa %s555, 1
    %557 = vsyncpa [#allocation5], 1
    %s558 = scalar_lea.sflag [#allocation5], 1
    %559 = vsyncpa %s558, 1

</llo_original>
